<compile_context>
chip_gen: v7x
topology: tpu7x:2x2x1
jax: 0.10.0
libtpu: 0.0.40
codegen_flags: <defaults>
</compile_context>

<pallas_src>
import jax
import jax.numpy as jnp
from jax import lax
from jax.experimental import pallas as pl
from jax.experimental.pallas import tpu as pltpu


def _make_gate_kernel(H, W, C, Cmid):
    """Fused gate: y = sigmoid(conv3x3(relu(conv3x3(x)))) on one (C, H*W) image."""
    HW = H * W
    f32 = jnp.float32

    def kernel(x_ref, w1_ref, b1_ref, w2_ref, b2_ref, y_ref):
        # x_ref : (1, C, HW) native dtype     w1_ref: (Cmid, 9*C) f32   b1_ref: (Cmid, 1)
        # w2_ref: (9*Cmid, 1) f32             b2_ref: (1, 1)
        # y_ref : (1, 1, HW) f32  (lane-dense gate, layout consumed by the rescale kernel)
        lane = lax.broadcasted_iota(jnp.int32, (1, HW), 1)
        col = lane % W

        def row_shift(a, dy):
            # a[:, i*W+j] -> a[:, clamp(i+dy, 0, H-1)*W + j]  (replication pad along H)
            if dy == 0 or H == 1:
                return a
            if dy < 0:
                return jnp.where(lane < W, a, pltpu.roll(a, W, axis=1))
            return jnp.where(lane >= HW - W, a, pltpu.roll(a, HW - W, axis=1))

        def col_shift(a, dx):
            # a[:, i*W+j] -> a[:, i*W + clamp(j+dx, 0, W-1)]  (replication pad along W)
            if dx == 0 or W == 1:
                return a
            if dx < 0:
                return jnp.where(col == 0, a, pltpu.roll(a, 1, axis=1))
            return jnp.where(col == W - 1, a, pltpu.roll(a, HW - 1, axis=1))

        x = x_ref[0].astype(f32)                                  # (C, HW)

        # ---- conv1 (C -> Cmid) + bias + ReLU: taps packed into K = 9*C, single MXU matmul.
        taps1 = []
        for dy in (-1, 0, 1):
            r = row_shift(x, dy)
            for dx in (-1, 0, 1):
                taps1.append(col_shift(r, dx))
        lhs1 = jnp.concatenate(taps1, axis=0)                     # (9*C, HW)
        h = jnp.dot(w1_ref[...], lhs1, preferred_element_type=f32)  # (Cmid, HW)
        h = jnp.maximum(h + b1_ref[...], 0.0)

        # ---- conv2 (Cmid -> 1) + bias + sigmoid: VPU broadcast-mul accumulated in vregs,
        #      one sublane reduce (no width-1 MXU matmul).
        acc = jnp.zeros((Cmid, HW), f32)
        t = 0
        for dy in (-1, 0, 1):
            r = row_shift(h, dy)
            for dx in (-1, 0, 1):
                acc = acc + col_shift(r, dx) * w2_ref[t * Cmid:(t + 1) * Cmid, :]
                t += 1
        g = jnp.sum(acc, axis=0, keepdims=True) + b2_ref[...]     # (1, HW)
        y_ref[0] = jax.nn.sigmoid(g)

    return kernel


def _scale_kernel(x_ref, y_ref, o_ref):
    # x_ref: (nb, C, T) native dtype, y_ref: (nb, 1, T) f32 -> o_ref: (nb, C, T) native dtype.
    # Native-dtype HBM traffic on the dominant pass; f32 only inside vregs.
    o_ref[...] = (x_ref[...].astype(jnp.float32) * y_ref[...]).astype(o_ref.dtype)


def pa_layer(x, w1, b1, w2, b2):
    """PALayer forward.

    x  : (N, C, H, W)
    w1 : (C//8, C, 3, 3), b1: (C//8,)   -- first conv (after ReplicationPad2d(1))
    w2 : (1, C//8, 3, 3), b2: (1,)      -- second conv (after ReplicationPad2d(1))
    returns (N, C, H, W) in x.dtype
    """
    n, c, h, w = x.shape
    cmid = w1.shape[0]
    hw = h * w
    f32 = jnp.float32

    x_flat = x.reshape(n, c, hw)                       # contiguous reshape (bitcast, no copy)

    # ---- tiny weight re-layouts (XLA, negligible; never touches full-C activations) ------
    # w1 packed tap-major along the contraction dim: row t*C + cc = w1[o, cc, ky, kx].
    w1_packed = jnp.transpose(w1.astype(f32), (0, 2, 3, 1)).reshape(cmid, 9 * c)
    b1_col = b1.astype(f32).reshape(cmid, 1)
    # w2 column, tap-major: row t*Cmid + cc = w2[0, cc, ky, kx].
    w2_col = jnp.transpose(w2.astype(f32)[0], (1, 2, 0)).reshape(9 * cmid, 1)
    b2_col = b2.astype(f32).reshape(1, 1)

    # ---- fused gate kernel: one pass over x, gate stays in VMEM, lane-dense output -------
    y = pl.pallas_call(
        _make_gate_kernel(h, w, c, cmid),
        out_shape=jax.ShapeDtypeStruct((n, 1, hw), f32),
        grid_spec=pltpu.PrefetchScalarGridSpec(
            num_scalar_prefetch=0,
            grid=(n,),
            in_specs=[
                pl.BlockSpec((1, c, hw), lambda i: (i, 0, 0)),
                pl.BlockSpec((cmid, 9 * c), lambda i: (0, 0)),
                pl.BlockSpec((cmid, 1), lambda i: (0, 0)),
                pl.BlockSpec((9 * cmid, 1), lambda i: (0, 0)),
                pl.BlockSpec((1, 1), lambda i: (0, 0)),
            ],
            out_specs=pl.BlockSpec((1, 1, hw), lambda i: (i, 0, 0)),
        ),
        compiler_params=pltpu.CompilerParams(
            dimension_semantics=("parallel",),
            vmem_limit_bytes=64 * 1024 * 1024),
    )(x_flat, w1_packed, b1_col, w2_col, b2_col)

    # ---- streaming rescale: o = x * y (the only other full-C HBM pass) --------------------
    # Largest lane-dense spatial tile that divides HW (falls back to full HW).
    t_lanes = hw
    for cand in (16384, 8192, 4096, 2048, 1024, 512, 256, 128):
        if hw % cand == 0:
            t_lanes = cand
            break
    # Block several batch rows per step to amortize per-step overhead (~4 MB per block).
    bytes_per_row = c * t_lanes * jnp.dtype(x.dtype).itemsize
    nb = 1
    for cand in range(n, 0, -1):
        if n % cand == 0 and cand * bytes_per_row <= 4 * 1024 * 1024:
            nb = cand
            break

    out = pl.pallas_call(
        _scale_kernel,
        out_shape=jax.ShapeDtypeStruct((n, c, hw), x.dtype),
        grid_spec=pltpu.PrefetchScalarGridSpec(
            num_scalar_prefetch=0,
            grid=(n // nb, hw // t_lanes),
            in_specs=[
                pl.BlockSpec((nb, c, t_lanes), lambda i, j: (i, 0, j)),
                pl.BlockSpec((nb, 1, t_lanes), lambda i, j: (i, 0, j)),
            ],
            out_specs=pl.BlockSpec((nb, c, t_lanes), lambda i, j: (i, 0, j)),
        ),
        compiler_params=pltpu.CompilerParams(
            dimension_semantics=("parallel", "parallel"),
            vmem_limit_bytes=64 * 1024 * 1024),
    )(x_flat, y)

    return out.reshape(n, c, h, w)


def _reference(x, w1, b1, w2, b2):
    """Pure-XLA reference replicating the PyTorch PALayer forward."""
    hp = jax.lax.Precision.HIGHEST
    xp = jnp.pad(x, ((0, 0), (0, 0), (1, 1), (1, 1)), mode="edge")
    h = lax.conv_general_dilated(xp, w1, (1, 1), "VALID",
                                 dimension_numbers=("NCHW", "OIHW", "NCHW"),
                                 precision=hp) + b1[None, :, None, None]
    h = jnp.maximum(h, 0.0)
    hpad = jnp.pad(h, ((0, 0), (0, 0), (1, 1), (1, 1)), mode="edge")
    y = lax.conv_general_dilated(hpad, w2, (1, 1), "VALID",
                                 dimension_numbers=("NCHW", "OIHW", "NCHW"),
                                 precision=hp) + b2[None, :, None, None]
    return x * jax.nn.sigmoid(y)


if __name__ == "__main__":
    # Small but module-consistent shapes (in_channels divisible by 8).
    N, C, H, W = 2, 16, 16, 16
    CMID = C // 8

    key = jax.random.PRNGKey(0)
    kx, k1, k2, k3, k4 = jax.random.split(key, 5)
    x = jax.random.normal(kx, (N, C, H, W), dtype=jnp.float32)
    w1 = jax.random.normal(k1, (CMID, C, 3, 3), dtype=jnp.float32) * 0.1
    b1 = jax.random.normal(k2, (CMID,), dtype=jnp.float32) * 0.1
    w2 = jax.random.normal(k3, (1, CMID, 3, 3), dtype=jnp.float32) * 0.1
    b2 = jax.random.normal(k4, (1,), dtype=jnp.float32) * 0.1

    pa_fn = jax.jit(pa_layer)
    out = jax.block_until_ready(pa_fn(x, w1, b1, w2, b2))
    ref = _reference(x, w1, b1, w2, b2)

    assert out.shape == (N, C, H, W)
    # Tolerance covers the MXU f32 multi-pass matmul vs the HIGHEST-precision XLA conv.
    assert jnp.allclose(out, ref, atol=5e-3, rtol=5e-3), float(jnp.max(jnp.abs(out - ref)))
    print("KERNEL_OK")
</pallas_src>

<mosaic_0001>
module attributes {stable_mosaic.version = 11 : i64} {
  func.func @_scale_kernel(%arg0: i32, %arg1: i32, %arg2: memref<2x16x256xf32, #tpu.memory_space<vmem>>, %arg3: memref<2x1x256xf32, #tpu.memory_space<vmem>>, %arg4: memref<2x16x256xf32, #tpu.memory_space<vmem>>) attributes {dimension_semantics = [#tpu.dimension_semantics<parallel>, #tpu.dimension_semantics<parallel>], iteration_bounds = array<i64: 1, 1>, scalar_prefetch = 0 : i64, scratch_operands = 0 : i64, tpu.core_type = #tpu.core_type<tc>, window_params = [{transform_indices = @transform_0, window_bounds = array<i64: 2, 16, 256>}, {transform_indices = @transform_1, window_bounds = array<i64: 2, 1, 256>}, {transform_indices = @transform_2, window_bounds = array<i64: 2, 16, 256>}]} {
    %c0 = arith.constant 0 : index
    %c0_0 = arith.constant 0 : index
    %c0_1 = arith.constant 0 : index
    %0 = vector.load %arg2[%c0, %c0_0, %c0_1] : memref<2x16x256xf32, #tpu.memory_space<vmem>>, vector<2x16x256xf32>
    %c0_2 = arith.constant 0 : index
    %c0_3 = arith.constant 0 : index
    %c0_4 = arith.constant 0 : index
    %1 = vector.load %arg3[%c0_2, %c0_3, %c0_4] : memref<2x1x256xf32, #tpu.memory_space<vmem>>, vector<2x1x256xf32>
    %2 = vector.broadcast %1 : vector<2x1x256xf32> to vector<2x16x256xf32>
    %3 = arith.mulf %0, %2 : vector<2x16x256xf32>
    %c0_5 = arith.constant 0 : index
    %c0_6 = arith.constant 0 : index
    %c0_7 = arith.constant 0 : index
    %4 = vector.load %arg4[%c0_5, %c0_6, %c0_7] : memref<2x16x256xf32, #tpu.memory_space<vmem>>, vector<2x16x256xf32>
    tpu.vector_store %arg4[%c0_5, %c0_6, %c0_7], %3 {strides = array<i32>} : memref<2x16x256xf32, #tpu.memory_space<vmem>>, vector<2x16x256xf32>,
    return
  }
  func.func @transform_0(%arg0: i32, %arg1: i32) -> (i32, i32, i32) {
    %c0_i32 = arith.constant 0 : i32
    %c0_i32_0 = arith.constant 0 : i32
    return %arg0, %c0_i32, %arg1 : i32, i32, i32
  }
  func.func @transform_1(%arg0: i32, %arg1: i32) -> (i32, i32, i32) {
    %c0_i32 = arith.constant 0 : i32
    %c0_i32_0 = arith.constant 0 : i32
    return %arg0, %c0_i32, %arg1 : i32, i32, i32
  }
  func.func @transform_2(%arg0: i32, %arg1: i32) -> (i32, i32, i32) {
    %c0_i32 = arith.constant 0 : i32
    %c0_i32_0 = arith.constant 0 : i32
    return %arg0, %c0_i32, %arg1 : i32, i32, i32
  }
}

module attributes {stable_mosaic.version = 11 : i64} {
  func.func @kernel(%arg0: i32, %arg1: memref<1x16x256xf32, #tpu.memory_space<vmem>>, %arg2: memref<2x144xf32, #tpu.memory_space<vmem>>, %arg3: memref<2x1xf32, #tpu.memory_space<vmem>>, %arg4: memref<18x1xf32, #tpu.memory_space<vmem>>, %arg5: memref<1x1xf32, #tpu.memory_space<vmem>>, %arg6: memref<1x1x256xf32, #tpu.memory_space<vmem>>) attributes {dimension_semantics = [#tpu.dimension_semantics<parallel>], iteration_bounds = array<i64: 2>, scalar_prefetch = 0 : i64, scratch_operands = 0 : i64, tpu.core_type = #tpu.core_type<tc>, window_params = [{transform_indices = @transform_0, window_bounds = array<i64: 1, 16, 256>}, {pipeline_mode = #tpu.pipeline_mode<synchronous>, transform_indices = @transform_1, window_bounds = array<i64: 2, 144>}, {pipeline_mode = #tpu.pipeline_mode<synchronous>, transform_indices = @transform_2, window_bounds = array<i64: 2, 1>}, {pipeline_mode = #tpu.pipeline_mode<synchronous>, transform_indices = @transform_3, window_bounds = array<i64: 18, 1>}, {pipeline_mode = #tpu.pipeline_mode<synchronous>, transform_indices = @transform_4, window_bounds = array<i64: 1, 1>}, {transform_indices = @transform_5, window_bounds = array<i64: 1, 1, 256>}]} {
    %0 = tpu.iota {dimensions = array<i32: 1>} : vector<1x256xi32>
    %c16_i32 = arith.constant 16 : i32
    %c0_i32 = arith.constant 0 : i32
    %1 = arith.cmpi eq, %c16_i32, %c0_i32 : i32
    %c1_i32 = arith.constant 1 : i32
    %2 = arith.select %1, %c1_i32, %c16_i32 : i32
    %3 = vector.broadcast %2 : i32 to vector<1x256xi32>
    %4 = arith.remsi %0, %3 : vector<1x256xi32>
    %c0_i32_0 = arith.constant 0 : i32
    %5 = vector.broadcast %c0_i32_0 : i32 to vector<1x256xi32>
    %6 = arith.cmpi ne, %4, %5 : vector<1x256xi32>
    %c0_i32_1 = arith.constant 0 : i32
    %7 = vector.broadcast %c0_i32_1 : i32 to vector<1x256xi32>
    %8 = arith.cmpi slt, %4, %7 : vector<1x256xi32>
    %c0_i32_2 = arith.constant 0 : i32
    %9 = arith.cmpi slt, %2, %c0_i32_2 : i32
    %10 = vector.broadcast %9 : i1 to vector<1x256xi1>
    %11 = vector.broadcast %10 : vector<1x256xi1> to vector<1x256xi1>
    %12 = arith.xori %8, %11 : vector<1x256xi1>
    %13 = arith.andi %12, %6 : vector<1x256xi1>
    %14 = vector.broadcast %2 : i32 to vector<1x256xi32>
    %15 = arith.addi %4, %14 : vector<1x256xi32>
    %16 = arith.select %13, %15, %4 : vector<1x256xi1>, vector<1x256xi32>
    %c0 = arith.constant 0 : index
    %c0_3 = arith.constant 0 : index
    %c0_4 = arith.constant 0 : index
    %17 = vector.load %arg1[%c0, %c0_3, %c0_4] : memref<1x16x256xf32, #tpu.memory_space<vmem>>, vector<1x16x256xf32>
    %18 = vector.shape_cast %17 : vector<1x16x256xf32> to vector<16x256xf32>
    %c16_i32_5 = arith.constant 16 : i32
    %19 = vector.broadcast %c16_i32_5 : i32 to vector<1x256xi32>
    %20 = arith.cmpi slt, %0, %19 : vector<1x256xi32>
    %c16_i32_6 = arith.constant 16 : i32
    %21 = tpu.dynamic_rotate %18 by %c16_i32_6 dim 1 : vector<16x256xf32>, i32 -> vector<16x256xf32>
    %22 = vector.shape_cast %20 : vector<1x256xi1> to vector<1x256xi1>
    %23 = vector.broadcast %22 : vector<1x256xi1> to vector<16x256xi1>
    %24 = arith.select %23, %18, %21 : vector<16x256xi1>, vector<16x256xf32>
    %c0_i32_7 = arith.constant 0 : i32
    %25 = vector.broadcast %c0_i32_7 : i32 to vector<1x256xi32>
    %26 = arith.cmpi eq, %16, %25 : vector<1x256xi32>
    %c1_i32_8 = arith.constant 1 : i32
    %27 = tpu.dynamic_rotate %24 by %c1_i32_8 dim 1 : vector<16x256xf32>, i32 -> vector<16x256xf32>
    %28 = vector.shape_cast %26 : vector<1x256xi1> to vector<1x256xi1>
    %29 = vector.broadcast %28 : vector<1x256xi1> to vector<16x256xi1>
    %30 = arith.select %29, %24, %27 : vector<16x256xi1>, vector<16x256xf32>
    %c15_i32 = arith.constant 15 : i32
    %31 = vector.broadcast %c15_i32 : i32 to vector<1x256xi32>
    %32 = arith.cmpi eq, %16, %31 : vector<1x256xi32>
    %c255_i32 = arith.constant 255 : i32
    %33 = tpu.dynamic_rotate %24 by %c255_i32 dim 1 : vector<16x256xf32>, i32 -> vector<16x256xf32>
    %34 = vector.shape_cast %32 : vector<1x256xi1> to vector<1x256xi1>
    %35 = vector.broadcast %34 : vector<1x256xi1> to vector<16x256xi1>
    %36 = arith.select %35, %24, %33 : vector<16x256xi1>, vector<16x256xf32>
    %c0_i32_9 = arith.constant 0 : i32
    %37 = vector.broadcast %c0_i32_9 : i32 to vector<1x256xi32>
    %38 = arith.cmpi eq, %16, %37 : vector<1x256xi32>
    %c1_i32_10 = arith.constant 1 : i32
    %39 = tpu.dynamic_rotate %18 by %c1_i32_10 dim 1 : vector<16x256xf32>, i32 -> vector<16x256xf32>
    %40 = vector.shape_cast %38 : vector<1x256xi1> to vector<1x256xi1>
    %41 = vector.broadcast %40 : vector<1x256xi1> to vector<16x256xi1>
    %42 = arith.select %41, %18, %39 : vector<16x256xi1>, vector<16x256xf32>
    %c15_i32_11 = arith.constant 15 : i32
    %43 = vector.broadcast %c15_i32_11 : i32 to vector<1x256xi32>
    %44 = arith.cmpi eq, %16, %43 : vector<1x256xi32>
    %c255_i32_12 = arith.constant 255 : i32
    %45 = tpu.dynamic_rotate %18 by %c255_i32_12 dim 1 : vector<16x256xf32>, i32 -> vector<16x256xf32>
    %46 = vector.shape_cast %44 : vector<1x256xi1> to vector<1x256xi1>
    %47 = vector.broadcast %46 : vector<1x256xi1> to vector<16x256xi1>
    %48 = arith.select %47, %18, %45 : vector<16x256xi1>, vector<16x256xf32>
    %c240_i32 = arith.constant 240 : i32
    %49 = vector.broadcast %c240_i32 : i32 to vector<1x256xi32>
    %50 = arith.cmpi sge, %0, %49 : vector<1x256xi32>
    %c240_i32_13 = arith.constant 240 : i32
    %51 = tpu.dynamic_rotate %18 by %c240_i32_13 dim 1 : vector<16x256xf32>, i32 -> vector<16x256xf32>
    %52 = vector.shape_cast %50 : vector<1x256xi1> to vector<1x256xi1>
    %53 = vector.broadcast %52 : vector<1x256xi1> to vector<16x256xi1>
    %54 = arith.select %53, %18, %51 : vector<16x256xi1>, vector<16x256xf32>
    %c0_i32_14 = arith.constant 0 : i32
    %55 = vector.broadcast %c0_i32_14 : i32 to vector<1x256xi32>
    %56 = arith.cmpi eq, %16, %55 : vector<1x256xi32>
    %c1_i32_15 = arith.constant 1 : i32
    %57 = tpu.dynamic_rotate %54 by %c1_i32_15 dim 1 : vector<16x256xf32>, i32 -> vector<16x256xf32>
    %58 = vector.shape_cast %56 : vector<1x256xi1> to vector<1x256xi1>
    %59 = vector.broadcast %58 : vector<1x256xi1> to vector<16x256xi1>
    %60 = arith.select %59, %54, %57 : vector<16x256xi1>, vector<16x256xf32>
    %c15_i32_16 = arith.constant 15 : i32
    %61 = vector.broadcast %c15_i32_16 : i32 to vector<1x256xi32>
    %62 = arith.cmpi eq, %16, %61 : vector<1x256xi32>
    %c255_i32_17 = arith.constant 255 : i32
    %63 = tpu.dynamic_rotate %54 by %c255_i32_17 dim 1 : vector<16x256xf32>, i32 -> vector<16x256xf32>
    %64 = vector.shape_cast %62 : vector<1x256xi1> to vector<1x256xi1>
    %65 = vector.broadcast %64 : vector<1x256xi1> to vector<16x256xi1>
    %66 = arith.select %65, %54, %63 : vector<16x256xi1>, vector<16x256xf32>
    %67 = tpu.concatenate %30, %24, %36, %42, %18, %48, %60, %54, %66 in 0 : vector<16x256xf32>, vector<16x256xf32>, vector<16x256xf32>, vector<16x256xf32>, vector<16x256xf32>, vector<16x256xf32>, vector<16x256xf32>, vector<16x256xf32>, vector<16x256xf32> -> vector<144x256xf32>
    %c0_18 = arith.constant 0 : index
    %c0_19 = arith.constant 0 : index
    %68 = vector.load %arg2[%c0_18, %c0_19] : memref<2x144xf32, #tpu.memory_space<vmem>>, vector<2x144xf32>
    %cst = arith.constant dense<0.000000e+00> : vector<2x256xf32>
    %69 = tpu.matmul %68, %67, %cst {dimension_numbers = #tpu.dot_dimension_numbers<[1], [0], [0], [1], [0, 0, 1, 1], [], []>} : vector<2x144xf32>, vector<144x256xf32>, vector<2x256xf32> -> vector<2x256xf32>
    %c0_20 = arith.constant 0 : index
    %c0_21 = arith.constant 0 : index
    %70 = vector.load %arg3[%c0_20, %c0_21] : memref<2x1xf32, #tpu.memory_space<vmem>>, vector<2x1xf32>
    %71 = vector.broadcast %70 : vector<2x1xf32> to vector<2x256xf32>
    %72 = arith.addf %69, %71 : vector<2x256xf32>
    %cst_22 = arith.constant 0.000000e+00 : f32
    %73 = vector.broadcast %cst_22 : f32 to vector<2x256xf32>
    %74 = arith.maximumf %72, %73 : vector<2x256xf32>
    %cst_23 = arith.constant 0.000000e+00 : f32
    %75 = vector.broadcast %cst_23 : f32 to vector<2x256xf32>
    %c16_i32_24 = arith.constant 16 : i32
    %76 = vector.broadcast %c16_i32_24 : i32 to vector<1x256xi32>
    %77 = arith.cmpi slt, %0, %76 : vector<1x256xi32>
    %c16_i32_25 = arith.constant 16 : i32
    %78 = tpu.dynamic_rotate %74 by %c16_i32_25 dim 1 : vector<2x256xf32>, i32 -> vector<2x256xf32>
    %79 = vector.shape_cast %77 : vector<1x256xi1> to vector<1x256xi1>
    %80 = vector.broadcast %79 : vector<1x256xi1> to vector<2x256xi1>
    %81 = arith.select %80, %74, %78 : vector<2x256xi1>, vector<2x256xf32>
    %c0_i32_26 = arith.constant 0 : i32
    %82 = vector.broadcast %c0_i32_26 : i32 to vector<1x256xi32>
    %83 = arith.cmpi eq, %16, %82 : vector<1x256xi32>
    %c1_i32_27 = arith.constant 1 : i32
    %84 = tpu.dynamic_rotate %81 by %c1_i32_27 dim 1 : vector<2x256xf32>, i32 -> vector<2x256xf32>
    %85 = vector.shape_cast %83 : vector<1x256xi1> to vector<1x256xi1>
    %86 = vector.broadcast %85 : vector<1x256xi1> to vector<2x256xi1>
    %87 = arith.select %86, %81, %84 : vector<2x256xi1>, vector<2x256xf32>
    %c0_28 = arith.constant 0 : index
    %c0_29 = arith.constant 0 : index
    %88 = vector.load %arg4[%c0_28, %c0_29] : memref<18x1xf32, #tpu.memory_space<vmem>>, vector<2x1xf32>
    %89 = vector.broadcast %88 : vector<2x1xf32> to vector<2x256xf32>
    %90 = arith.mulf %87, %89 : vector<2x256xf32>
    %91 = arith.addf %75, %90 : vector<2x256xf32>
    %c2 = arith.constant 2 : index
    %c0_30 = arith.constant 0 : index
    %92 = vector.load %arg4[%c2, %c0_30] : memref<18x1xf32, #tpu.memory_space<vmem>>, vector<2x1xf32>
    %93 = vector.broadcast %92 : vector<2x1xf32> to vector<2x256xf32>
    %94 = arith.mulf %81, %93 : vector<2x256xf32>
    %95 = arith.addf %91, %94 : vector<2x256xf32>
    %c15_i32_31 = arith.constant 15 : i32
    %96 = vector.broadcast %c15_i32_31 : i32 to vector<1x256xi32>
    %97 = arith.cmpi eq, %16, %96 : vector<1x256xi32>
    %c255_i32_32 = arith.constant 255 : i32
    %98 = tpu.dynamic_rotate %81 by %c255_i32_32 dim 1 : vector<2x256xf32>, i32 -> vector<2x256xf32>
    %99 = vector.shape_cast %97 : vector<1x256xi1> to vector<1x256xi1>
    %100 = vector.broadcast %99 : vector<1x256xi1> to vector<2x256xi1>
    %101 = arith.select %100, %81, %98 : vector<2x256xi1>, vector<2x256xf32>
    %c4 = arith.constant 4 : index
    %c0_33 = arith.constant 0 : index
    %102 = vector.load %arg4[%c4, %c0_33] : memref<18x1xf32, #tpu.memory_space<vmem>>, vector<2x1xf32>
    %103 = vector.broadcast %102 : vector<2x1xf32> to vector<2x256xf32>
    %104 = arith.mulf %101, %103 : vector<2x256xf32>
    %105 = arith.addf %95, %104 : vector<2x256xf32>
    %c0_i32_34 = arith.constant 0 : i32
    %106 = vector.broadcast %c0_i32_34 : i32 to vector<1x256xi32>
    %107 = arith.cmpi eq, %16, %106 : vector<1x256xi32>
    %c1_i32_35 = arith.constant 1 : i32
    %108 = tpu.dynamic_rotate %74 by %c1_i32_35 dim 1 : vector<2x256xf32>, i32 -> vector<2x256xf32>
    %109 = vector.shape_cast %107 : vector<1x256xi1> to vector<1x256xi1>
    %110 = vector.broadcast %109 : vector<1x256xi1> to vector<2x256xi1>
    %111 = arith.select %110, %74, %108 : vector<2x256xi1>, vector<2x256xf32>
    %c6 = arith.constant 6 : index
    %c0_36 = arith.constant 0 : index
    %112 = vector.load %arg4[%c6, %c0_36] : memref<18x1xf32, #tpu.memory_space<vmem>>, vector<2x1xf32>
    %113 = vector.broadcast %112 : vector<2x1xf32> to vector<2x256xf32>
    %114 = arith.mulf %111, %113 : vector<2x256xf32>
    %115 = arith.addf %105, %114 : vector<2x256xf32>
    %c8 = arith.constant 8 : index
    %c0_37 = arith.constant 0 : index
    %116 = vector.load %arg4[%c8, %c0_37] : memref<18x1xf32, #tpu.memory_space<vmem>>, vector<2x1xf32>
    %117 = vector.broadcast %116 : vector<2x1xf32> to vector<2x256xf32>
    %118 = arith.mulf %74, %117 : vector<2x256xf32>
    %119 = arith.addf %115, %118 : vector<2x256xf32>
    %c15_i32_38 = arith.constant 15 : i32
    %120 = vector.broadcast %c15_i32_38 : i32 to vector<1x256xi32>
    %121 = arith.cmpi eq, %16, %120 : vector<1x256xi32>
    %c255_i32_39 = arith.constant 255 : i32
    %122 = tpu.dynamic_rotate %74 by %c255_i32_39 dim 1 : vector<2x256xf32>, i32 -> vector<2x256xf32>
    %123 = vector.shape_cast %121 : vector<1x256xi1> to vector<1x256xi1>
    %124 = vector.broadcast %123 : vector<1x256xi1> to vector<2x256xi1>
    %125 = arith.select %124, %74, %122 : vector<2x256xi1>, vector<2x256xf32>
    %c10 = arith.constant 10 : index
    %c0_40 = arith.constant 0 : index
    %126 = vector.load %arg4[%c10, %c0_40] : memref<18x1xf32, #tpu.memory_space<vmem>>, vector<2x1xf32>
    %127 = vector.broadcast %126 : vector<2x1xf32> to vector<2x256xf32>
    %128 = arith.mulf %125, %127 : vector<2x256xf32>
    %129 = arith.addf %119, %128 : vector<2x256xf32>
    %c240_i32_41 = arith.constant 240 : i32
    %130 = vector.broadcast %c240_i32_41 : i32 to vector<1x256xi32>
    %131 = arith.cmpi sge, %0, %130 : vector<1x256xi32>
    %c240_i32_42 = arith.constant 240 : i32
    %132 = tpu.dynamic_rotate %74 by %c240_i32_42 dim 1 : vector<2x256xf32>, i32 -> vector<2x256xf32>
    %133 = vector.shape_cast %131 : vector<1x256xi1> to vector<1x256xi1>
    %134 = vector.broadcast %133 : vector<1x256xi1> to vector<2x256xi1>
    %135 = arith.select %134, %74, %132 : vector<2x256xi1>, vector<2x256xf32>
    %c0_i32_43 = arith.constant 0 : i32
    %136 = vector.broadcast %c0_i32_43 : i32 to vector<1x256xi32>
    %137 = arith.cmpi eq, %16, %136 : vector<1x256xi32>
    %c1_i32_44 = arith.constant 1 : i32
    %138 = tpu.dynamic_rotate %135 by %c1_i32_44 dim 1 : vector<2x256xf32>, i32 -> vector<2x256xf32>
    %139 = vector.shape_cast %137 : vector<1x256xi1> to vector<1x256xi1>
    %140 = vector.broadcast %139 : vector<1x256xi1> to vector<2x256xi1>
    %141 = arith.select %140, %135, %138 : vector<2x256xi1>, vector<2x256xf32>
    %c12 = arith.constant 12 : index
    %c0_45 = arith.constant 0 : index
    %142 = vector.load %arg4[%c12, %c0_45] : memref<18x1xf32, #tpu.memory_space<vmem>>, vector<2x1xf32>
    %143 = vector.broadcast %142 : vector<2x1xf32> to vector<2x256xf32>
    %144 = arith.mulf %141, %143 : vector<2x256xf32>
    %145 = arith.addf %129, %144 : vector<2x256xf32>
    %c14 = arith.constant 14 : index
    %c0_46 = arith.constant 0 : index
    %146 = vector.load %arg4[%c14, %c0_46] : memref<18x1xf32, #tpu.memory_space<vmem>>, vector<2x1xf32>
    %147 = vector.broadcast %146 : vector<2x1xf32> to vector<2x256xf32>
    %148 = arith.mulf %135, %147 : vector<2x256xf32>
    %149 = arith.addf %145, %148 : vector<2x256xf32>
    %c15_i32_47 = arith.constant 15 : i32
    %150 = vector.broadcast %c15_i32_47 : i32 to vector<1x256xi32>
    %151 = arith.cmpi eq, %16, %150 : vector<1x256xi32>
    %c255_i32_48 = arith.constant 255 : i32
    %152 = tpu.dynamic_rotate %135 by %c255_i32_48 dim 1 : vector<2x256xf32>, i32 -> vector<2x256xf32>
    %153 = vector.shape_cast %151 : vector<1x256xi1> to vector<1x256xi1>
    %154 = vector.broadcast %153 : vector<1x256xi1> to vector<2x256xi1>
    %155 = arith.select %154, %135, %152 : vector<2x256xi1>, vector<2x256xf32>
    %c16 = arith.constant 16 : index
    %c0_49 = arith.constant 0 : index
    %156 = vector.load %arg4[%c16, %c0_49] : memref<18x1xf32, #tpu.memory_space<vmem>>, vector<2x1xf32>
    %157 = vector.broadcast %156 : vector<2x1xf32> to vector<2x256xf32>
    %158 = arith.mulf %155, %157 : vector<2x256xf32>
    %159 = arith.addf %149, %158 : vector<2x256xf32>
    %cst_50 = arith.constant dense<0.000000e+00> : vector<256xf32>
    %160 = vector.multi_reduction <add>, %159, %cst_50 [0] : vector<2x256xf32> to vector<256xf32>
    %161 = vector.shape_cast %160 : vector<256xf32> to vector<1x256xf32>
    %c0_51 = arith.constant 0 : index
    %c0_52 = arith.constant 0 : index
    %162 = vector.load %arg5[%c0_51, %c0_52] : memref<1x1xf32, #tpu.memory_space<vmem>>, vector<1x1xf32>
    %163 = vector.broadcast %162 : vector<1x1xf32> to vector<1x256xf32>
    %164 = arith.addf %161, %163 : vector<1x256xf32>
    %165 = arith.negf %164 : vector<1x256xf32>
    %166 = math.exp %165 : vector<1x256xf32>
    %cst_53 = arith.constant 1.000000e+00 : f32
    %167 = vector.broadcast %cst_53 : f32 to vector<1x256xf32>
    %168 = arith.addf %167, %166 : vector<1x256xf32>
    %169 = arith.divf %167, %168 : vector<1x256xf32>
    %c0_54 = arith.constant 0 : index
    %c0_55 = arith.constant 0 : index
    %c0_56 = arith.constant 0 : index
    %170 = vector.load %arg6[%c0_54, %c0_55, %c0_56] : memref<1x1x256xf32, #tpu.memory_space<vmem>>, vector<1x1x256xf32>
    %171 = vector.shape_cast %170 : vector<1x1x256xf32> to vector<1x256xf32>
    %172 = vector.shape_cast %169 : vector<1x256xf32> to vector<1x1x256xf32>
    tpu.vector_store %arg6[%c0_54, %c0_55, %c0_56], %172 {strides = array<i32>} : memref<1x1x256xf32, #tpu.memory_space<vmem>>, vector<1x1x256xf32>,
    return
  }
  func.func @transform_0(%arg0: i32) -> (i32, i32, i32) {
    %c0_i32 = arith.constant 0 : i32
    %c0_i32_0 = arith.constant 0 : i32
    %c0_i32_1 = arith.constant 0 : i32
    return %arg0, %c0_i32, %c0_i32_0 : i32, i32, i32
  }
  func.func @transform_1(%arg0: i32) -> (i32, i32) {
    %c0_i32 = arith.constant 0 : i32
    %c0_i32_0 = arith.constant 0 : i32
    %c0_i32_1 = arith.constant 0 : i32
    return %c0_i32, %c0_i32_0 : i32, i32
  }
  func.func @transform_2(%arg0: i32) -> (i32, i32) {
    %c0_i32 = arith.constant 0 : i32
    %c0_i32_0 = arith.constant 0 : i32
    %c0_i32_1 = arith.constant 0 : i32
    return %c0_i32, %c0_i32_0 : i32, i32
  }
  func.func @transform_3(%arg0: i32) -> (i32, i32) {
    %c0_i32 = arith.constant 0 : i32
    %c0_i32_0 = arith.constant 0 : i32
    %c0_i32_1 = arith.constant 0 : i32
    return %c0_i32, %c0_i32_0 : i32, i32
  }
  func.func @transform_4(%arg0: i32) -> (i32, i32) {
    %c0_i32 = arith.constant 0 : i32
    %c0_i32_0 = arith.constant 0 : i32
    %c0_i32_1 = arith.constant 0 : i32
    return %c0_i32, %c0_i32_0 : i32, i32
  }
  func.func @transform_5(%arg0: i32) -> (i32, i32, i32) {
    %c0_i32 = arith.constant 0 : i32
    %c0_i32_0 = arith.constant 0 : i32
    %c0_i32_1 = arith.constant 0 : i32
    return %arg0, %c0_i32, %c0_i32_0 : i32, i32, i32
  }
}

</mosaic_0001>

<llo_original>
// kernel: pa_layer.3
$region0: #{pa_layer.3}
  #allocation0 [shape = 'u32[]', space=smem, size = 0x4, offset = 0x4, fixed_abs, tag = 'smem constant byte address 0x4 - core index']
  #allocation1 [shape = 'u32[144,128]{1,0:T(1,128)}', space=vmem, size = 0x12000, scoped, tag = 'internal scratch']
  %s0 = inlined_call_operand.hbm [shape: f32[2,16,256], index: 0, kind: input, shape index: {}]
  %s1 = inlined_call_operand.hbm [shape: f32[2,1,256], index: 1, kind: input, shape index: {}]
  %s2 = inlined_call_operand.hbm [shape: f32[2,16,256], index: 2, kind: output, shape index: {}]
  %s3 = sld [smem:[#allocation0]]
  $region26: #{pa_layer.3} parent=0
    _
  %s5 = ssub.s32 1, %s3
  %s6 = scalar_select 0, %s5, %s3
  $region1: #{pa_layer.3} parent=0
    #allocation2 [shape = 'u8[32768]{0}', space=vmem, size = 0x8000, scoped, tag = 'input window, operand 0, single buffered']
    #allocation3 [shape = 's32[1]{0}', space=sflag, size = 0x4, scoped, tag = 'scoped memory for pa_layer.3']
    #allocation4 [shape = 's32[1]{0}', space=sflag, size = 0x4, scoped, tag = 'scoped memory for pa_layer.3']
    #allocation5 [shape = 'u8[2048]{0}', space=vmem, size = 0x800, scoped, tag = 'input window, operand 1, single buffered']
    #allocation6 [shape = 's32[1]{0}', space=sflag, size = 0x4, scoped, tag = 'scoped memory for pa_layer.3']
    #allocation7 [shape = 'u8[32768]{0}', space=vmem, size = 0x8000, scoped, tag = 'output window, operand 0, single buffered']
    %7 = vsyncpa [#allocation3], 0
    %8 = vsyncpa [#allocation6], 0
    %9 = vsyncpa [#allocation4], 0
    // Predicated region
    $region2: #{pa_layer.3} parent=1 // pred_check
      _
    $region3: #{pa_layer.3} parent=1 // pred_check_branch
      %11 = sbr.rel (0) target = $region5
    $region4: #{pa_layer.3} parent=1 // pred_region
      %s13 = ssub.s32 1024, 1024
      %14 = vsyncadd [#allocation3], %s13
      %s15 = sshll.u32 [#allocation2], 4
      %s16 = int_to_ptr.vmem [resolvable:$true] %s15
      %21 = dma.hbm_to_vmem [thread:$0]  %s0, 1024, %s16, [#allocation3], 256, 256, 16
    $region5: #{pa_layer.3} parent=1 // pred_fallthru
      _
    // Predicated region
    $region6: #{pa_layer.3} parent=1 // pred_check
      _
    $region7: #{pa_layer.3} parent=1 // pred_check_branch
      %23 = sbr.rel (0) target = $region9
    $region8: #{pa_layer.3} parent=1 // pred_region
      %s25 = ssub.s32 64, 64
      %26 = vsyncadd [#allocation6], %s25
      %s27 = sshll.u32 [#allocation5], 4
      %s28 = int_to_ptr.vmem [resolvable:$true] %s27
      %33 = dma.hbm_to_vmem [thread:$0]  %s1, 64, %s28, [#allocation6], 32, 32, 2
    $region9: #{pa_layer.3} parent=1 // pred_fallthru
      _
    // Predicated region
    $region10: #{pa_layer.3} parent=1 // pred_check
      _
    $region11: #{pa_layer.3} parent=1 // pred_check_branch
      %35 = sbr.rel (0) target = $region13
    $region12: #{pa_layer.3} parent=1 // pred_region
      %36 = dma.done [#allocation3], 1024
    $region13: #{pa_layer.3} parent=1 // pred_fallthru
      _
    // Predicated region
    $region14: #{pa_layer.3} parent=1 // pred_check
      _
    $region15: #{pa_layer.3} parent=1 // pred_check_branch
      %38 = sbr.rel (0) target = $region17
    $region16: #{pa_layer.3} parent=1 // pred_region
      %39 = dma.done [#allocation6], 64
    $region17: #{pa_layer.3} parent=1 // pred_fallthru
      _
    %v40 = vld [vmem:[#allocation2] sm:$0xff]
    %v41 = vld [vmem:[#allocation2 + $0x8] sm:$0xff]
    %v42 = vld [vmem:[#allocation2 + $0x10] sm:$0xff]
    %v43 = vld [vmem:[#allocation2 + $0x18] sm:$0xff]
    %v44 = vld [vmem:[#allocation2 + $0x20] sm:$0xff]
    %v45 = vld [vmem:[#allocation2 + $0x28] sm:$0xff]
    %v46 = vld [vmem:[#allocation2 + $0x30] sm:$0xff]
    %v47 = vld [vmem:[#allocation2 + $0x38] sm:$0xff]
    %v48 = vld [vmem:[#allocation5] sm:$0x3]
    %v49 = vld [vmem:[#allocation5 + $0x2] sm:$0x3]
    %v52 = vlaneseq
    %v53 = vshrl.u32 %v52, 7
    %v54 = vsub.s32 0, %v53
    %v55 = vrot.slane %v48, %v54
    %v56 = vlaneseq
    %v57 = vshrl.u32 %v56, 7
    %v58 = vsub.s32 1, %v57
    %v59 = vrot.slane %v48, %v58
    %v60 = vlaneseq
    %v61 = vshrl.u32 %v60, 7
    %v62 = vsub.s32 0, %v61
    %v63 = vrot.slane %v49, %v62
    %v64 = vlaneseq
    %v65 = vshrl.u32 %v64, 7
    %v66 = vsub.s32 1, %v65
    %v67 = vrot.slane %v49, %v66
    %v72 = vmul.f32 %v40, %v55
    %v73 = vmul.f32 %v41, %v59
    %v74 = vmul.f32 %v42, %v55
    %v75 = vmul.f32 %v43, %v59
    %v76 = vmul.f32 %v44, %v63
    %v77 = vmul.f32 %v45, %v67
    %v78 = vmul.f32 %v46, %v63
    %v79 = vmul.f32 %v47, %v67
    %80 = vst [vmem:[#allocation7] sm:$0xff] %v72
    %81 = vst [vmem:[#allocation7 + $0x8] sm:$0xff] %v73
    %82 = vst [vmem:[#allocation7 + $0x10] sm:$0xff] %v74
    %83 = vst [vmem:[#allocation7 + $0x18] sm:$0xff] %v75
    %84 = vst [vmem:[#allocation7 + $0x20] sm:$0xff] %v76
    %85 = vst [vmem:[#allocation7 + $0x28] sm:$0xff] %v77
    %86 = vst [vmem:[#allocation7 + $0x30] sm:$0xff] %v78
    %87 = vst [vmem:[#allocation7 + $0x38] sm:$0xff] %v79
    // Predicated region
    $region18: #{pa_layer.3} parent=1 // pred_check
      _
    $region19: #{pa_layer.3} parent=1 // pred_check_branch
      %89 = sbr.rel (0) target = $region21
    $region20: #{pa_layer.3} parent=1 // pred_region
      %s91 = ssub.s32 1024, 1024
      %92 = vsyncadd [#allocation4], %s91
      %s93 = sshll.u32 [#allocation7], 4
      %s94 = int_to_ptr.vmem [resolvable:$true] %s93
      %99 = dma.vmem_to_hbm [thread:$0]  %s94, 1024, %s2, [#allocation4], 256, 256, 16
    $region21: #{pa_layer.3} parent=1 // pred_fallthru
      _
    // Predicated region
    $region22: #{pa_layer.3} parent=1 // pred_check
      _
    $region23: #{pa_layer.3} parent=1 // pred_check_branch
      %101 = sbr.rel (0) target = $region25
    $region24: #{pa_layer.3} parent=1 // pred_region
      %102 = dma.done [#allocation4], 1024
    $region25: #{pa_layer.3} parent=1 // pred_fallthru
      _
    %103 = vsyncpa [#allocation3], 1
    %104 = vsyncpa [#allocation6], 1
    %105 = vsyncpa [#allocation4], 1

// kernel: pa_layer.2
$region0: #{pa_layer.2}
  #allocation0 [shape = 'u32[]', space=smem, size = 0x4, offset = 0x4, fixed_abs, tag = 'smem constant byte address 0x4 - core index']
  #allocation1 [shape = 'u32[144,128]{1,0:T(1,128)}', space=vmem, size = 0x12000, scoped, tag = 'internal scratch']
  #allocation2 [shape = 'f32[1,1]{1,0:T(1,128)S(1)}', space=vmem, size = 0x200, scoped, tag = 'scoped memory for pa_layer.2']
  %s0 = inlined_call_operand.hbm [shape: f32[2,16,256], index: 0, kind: input, shape index: {}]
  %s1 = inlined_call_operand.hbm [shape: f32[2,144], index: 1, kind: input, shape index: {}]
  %s2 = inlined_call_operand.hbm [shape: f32[2,1], index: 2, kind: input, shape index: {}]
  %s3 = inlined_call_operand.hbm [shape: f32[18,1], index: 3, kind: input, shape index: {}]
  %s4 = inlined_call_operand.<no memory space> [shape: f32[1,1], index: 4, kind: input, shape index: {}]
  %s5 = inlined_call_operand.hbm [shape: f32[2,1,256], index: 5, kind: output, shape index: {}]
  %s6 = sld [smem:[#allocation0]]
  $region69: #{pa_layer.2} parent=0
    _
  %s8 = ssub.s32 1, %s6
  %s9 = scalar_select 0, %s8, %s6
  %v10 = vstv %s4
  %11 = vst [vmem:[#allocation2] sm:$0x1] %v10
  $region1: #{pa_layer.2} parent=0
    #allocation3 [shape = 'u8[32768]{0}', space=vmem, size = 0x8000, scoped, tag = 'input window, operand 0']
    #allocation4 [shape = 's32[2]{0}', space=sflag, size = 0x8, scoped, tag = 'scoped memory for pa_layer.2']
    #allocation5 [shape = 's32[2]{0}', space=sflag, size = 0x8, scoped, tag = 'scoped memory for pa_layer.2']
    #allocation6 [shape = 'u8[2048]{0}', space=vmem, size = 0x800, scoped, tag = 'input window, operand 1, single buffered']
    #allocation7 [shape = 's32[1]{0}', space=sflag, size = 0x4, scoped, tag = 'scoped memory for pa_layer.2']
    #allocation8 [shape = 'u8[1024]{0}', space=vmem, size = 0x400, scoped, tag = 'input window, operand 2, single buffered']
    #allocation9 [shape = 'u8[12288]{0}', space=vmem, size = 0x3000, scoped, tag = 'input window, operand 3, single buffered']
    #allocation10 [shape = 's32[1]{0}', space=sflag, size = 0x4, scoped, tag = 'scoped memory for pa_layer.2']
    #allocation11 [shape = 'u8[2048]{0}', space=vmem, size = 0x800, scoped, tag = 'output window, operand 0']
    %12 = vsyncpa [#allocation4], 0
    %s13 = scalar_lea.sflag [#allocation4], 1
    %14 = vsyncpa %s13, 0
    %15 = vsyncpa [#allocation7], 0
    %16 = vsyncpa [#allocation10], 0
    %17 = vsyncpa [#allocation5], 0
    %s18 = scalar_lea.sflag [#allocation5], 1
    %19 = vsyncpa %s18, 0
    loop: start=0, step=1, limit=4
    $region2: #{pa_layer.2} parent=1 // loop_pre_header
      _
    $region3: #{pa_layer.2} parent=1 // loop_header
      %s21 = sphi 0, %s25
      %p22 = scmp.ge.s32.totalorder %s21, 4
      %s31 = sphi 0, %s33
      %s34 = sphi 0, %s31
      %s35 = sphi 0, %s34
      %s51 = sphi 0, %s35
      %s55 = sphi 0, %s55
      %s57 = sphi 0, %s55
      %s58 = sphi 0, %s57
      %s72 = sphi 0, %s58
      %s76 = sphi 0, %s76
      %s78 = sphi 0, %s76
      %s79 = sphi 0, %s78
      %s93 = sphi 0, %s79
      %s97 = sphi 0, %s97
      %s99 = sphi 0, %s97
      %s100 = sphi 0, %s99
      %s114 = sphi 0, %s100
      %s118 = sphi 0, %s118
      %s120 = sphi 0, %s118
      %s121 = sphi 0, %s120
      %s135 = sphi 0, %s121
      %s141 = sphi 0, %s143
      %s144 = sphi 0, %s141
      %s145 = sphi 0, %s144
      %s161 = sphi 0, %s145
    $region4: #{pa_layer.2} parent=1 // loop_header_branch
      %24 = sbr.rel (%p22) target = $region8
    $region5: #{pa_layer.2} parent=1 // loop_body
      %s26 = ssub.s32 %s21, 1
      %s27 = ssub.s32 %s21, 2
      %s28 = sadd.s32 %s21, 1
      %s29 = ssub.s32 %s21, %s28
      %p30 = scmp.eq.s32.totalorder %s29, 0
      %s32 = sadd.s32 %s31, 1
      %s33 = scalar_select %p30, %s31, %s32
      %p36 = pneg %p30
      %p37 = scmp.eq.s32.totalorder %s21, 1
      %p38 = por %p36, %p37
      %p39 = scmp.ne.s32.totalorder %s31, %s34
      %p40 = scmp.eq.s32.totalorder %s21, 0
      %p41 = por %p39, %p40
      %p42 = scmp.ne.s32.totalorder %s31, %s34
      %p43 = scmp.eq.s32.totalorder %s26, 1
      %p44 = por %p42, %p43
      %p45 = scmp.ne.s32.totalorder %s34, %s35
      %p46 = scmp.eq.s32.totalorder %s26, 0
      %p47 = por %p45, %p46
      %p48 = scmp.ne.s32.totalorder %s34, %s35
      %p49 = scmp.eq.s32.totalorder %s27, 1
      %p50 = por %p48, %p49
      %p52 = scmp.ne.s32.totalorder %s35, %s51
      %p53 = scmp.eq.s32.totalorder %s27, 0
      %p54 = por %p52, %p53
      %s56 = sadd.s32 %s55, 1
      %p59 = scmp.eq.s32.totalorder %s21, 1
      %p60 = scmp.ne.s32.totalorder %s55, %s57
      %p61 = scmp.eq.s32.totalorder %s21, 0
      %p62 = por %p60, %p61
      %p63 = scmp.ne.s32.totalorder %s55, %s57
      %p64 = scmp.eq.s32.totalorder %s26, 1
      %p65 = por %p63, %p64
      %p66 = scmp.ne.s32.totalorder %s57, %s58
      %p67 = scmp.eq.s32.totalorder %s26, 0
      %p68 = por %p66, %p67
      %p69 = scmp.ne.s32.totalorder %s57, %s58
      %p70 = scmp.eq.s32.totalorder %s27, 1
      %p71 = por %p69, %p70
      %p73 = scmp.ne.s32.totalorder %s58, %s72
      %p74 = scmp.eq.s32.totalorder %s27, 0
      %p75 = por %p73, %p74
      %s77 = sadd.s32 %s76, 1
      %p80 = scmp.eq.s32.totalorder %s21, 1
      %p81 = scmp.ne.s32.totalorder %s76, %s78
      %p82 = scmp.eq.s32.totalorder %s21, 0
      %p83 = por %p81, %p82
      %p84 = scmp.ne.s32.totalorder %s76, %s78
      %p85 = scmp.eq.s32.totalorder %s26, 1
      %p86 = por %p84, %p85
      %p87 = scmp.ne.s32.totalorder %s78, %s79
      %p88 = scmp.eq.s32.totalorder %s26, 0
      %p89 = por %p87, %p88
      %p90 = scmp.ne.s32.totalorder %s78, %s79
      %p91 = scmp.eq.s32.totalorder %s27, 1
      %p92 = por %p90, %p91
      %p94 = scmp.ne.s32.totalorder %s79, %s93
      %p95 = scmp.eq.s32.totalorder %s27, 0
      %p96 = por %p94, %p95
      %s98 = sadd.s32 %s97, 1
      %p101 = scmp.eq.s32.totalorder %s21, 1
      %p102 = scmp.ne.s32.totalorder %s97, %s99
      %p103 = scmp.eq.s32.totalorder %s21, 0
      %p104 = por %p102, %p103
      %p105 = scmp.ne.s32.totalorder %s97, %s99
      %p106 = scmp.eq.s32.totalorder %s26, 1
      %p107 = por %p105, %p106
      %p108 = scmp.ne.s32.totalorder %s99, %s100
      %p109 = scmp.eq.s32.totalorder %s26, 0
      %p110 = por %p108, %p109
      %p111 = scmp.ne.s32.totalorder %s99, %s100
      %p112 = scmp.eq.s32.totalorder %s27, 1
      %p113 = por %p111, %p112
      %p115 = scmp.ne.s32.totalorder %s100, %s114
      %p116 = scmp.eq.s32.totalorder %s27, 0
      %p117 = por %p115, %p116
      %s119 = sadd.s32 %s118, 1
      %p122 = scmp.eq.s32.totalorder %s21, 1
      %p123 = scmp.ne.s32.totalorder %s118, %s120
      %p124 = scmp.eq.s32.totalorder %s21, 0
      %p125 = por %p123, %p124
      %p126 = scmp.ne.s32.totalorder %s118, %s120
      %p127 = scmp.eq.s32.totalorder %s26, 1
      %p128 = por %p126, %p127
      %p129 = scmp.ne.s32.totalorder %s120, %s121
      %p130 = scmp.eq.s32.totalorder %s26, 0
      %p131 = por %p129, %p130
      %p132 = scmp.ne.s32.totalorder %s120, %s121
      %p133 = scmp.eq.s32.totalorder %s27, 1
      %p134 = por %p132, %p133
      %p136 = scmp.ne.s32.totalorder %s121, %s135
      %p137 = scmp.eq.s32.totalorder %s27, 0
      %p138 = por %p136, %p137
      %s139 = ssub.s32 %s21, %s28
      %p140 = scmp.eq.s32.totalorder %s139, 0
      %s142 = sadd.s32 %s141, 1
      %s143 = scalar_select %p140, %s141, %s142
      %p146 = pneg %p140
      %p147 = scmp.eq.s32.totalorder %s21, 1
      %p148 = por %p146, %p147
      %p149 = scmp.ne.s32.totalorder %s141, %s144
      %p150 = scmp.eq.s32.totalorder %s21, 0
      %p151 = por %p149, %p150
      %p152 = scmp.ne.s32.totalorder %s141, %s144
      %p153 = scmp.eq.s32.totalorder %s26, 1
      %p154 = por %p152, %p153
      %p155 = scmp.ne.s32.totalorder %s144, %s145
      %p156 = scmp.eq.s32.totalorder %s26, 0
      %p157 = por %p155, %p156
      %p158 = scmp.ne.s32.totalorder %s144, %s145
      %p159 = scmp.eq.s32.totalorder %s27, 1
      %p160 = por %p158, %p159
      %p162 = scmp.ne.s32.totalorder %s145, %s161
      %p163 = scmp.eq.s32.totalorder %s27, 0
      %p164 = por %p162, %p163
      %p165 = scmp.le.s32.totalorder 1, %s21
      %p166 = scmp.lt.s32.totalorder %s21, 3
      %p167 = pnand %p165, %p166
      %p168 = pneg %p167
      // Predicated region
      $region9: #{pa_layer.2} parent=5 // pred_check
        _
      $region10: #{pa_layer.2} parent=5 // pred_check_branch
        %170 = sbr.rel (%p167) target = $region12
      $region11: #{pa_layer.2} parent=5 // pred_region
        %s171 = ssub.s32 %s21, 1
        // Predicated region
        $region13: #{pa_layer.2} parent=11 // pred_check
          %p172 = pneg %p68
        $region14: #{pa_layer.2} parent=11 // pred_check_branch
          %174 = sbr.rel (%p172) target = $region16
        $region15: #{pa_layer.2} parent=11 // pred_region
          %s176 = ssub.s32 64, 64
          %177 = vsyncadd [#allocation7], %s176
          %s179 = sshll.u32 [#allocation6], 4
          %s180 = int_to_ptr.vmem [resolvable:$true] %s179
          %182 = dma.hbm_to_vmem [thread:$0]  %s1, 64, %s180, [#allocation7]
        $region16: #{pa_layer.2} parent=11 // pred_fallthru
          _
        // Predicated region
        $region17: #{pa_layer.2} parent=11 // pred_check
          %p183 = pneg %p89
        $region18: #{pa_layer.2} parent=11 // pred_check_branch
          %185 = sbr.rel (%p183) target = $region20
        $region19: #{pa_layer.2} parent=11 // pred_region
          %s187 = ssub.s32 32, 32
          %188 = vsyncadd [#allocation7], %s187
          %s190 = sshll.u32 [#allocation8], 4
          %s191 = int_to_ptr.vmem [resolvable:$true] %s190
          %193 = dma.hbm_to_vmem [thread:$0]  %s2, 32, %s191, [#allocation7]
        $region20: #{pa_layer.2} parent=11 // pred_fallthru
          _
        // Predicated region
        $region21: #{pa_layer.2} parent=11 // pred_check
          %p194 = pneg %p110
        $region22: #{pa_layer.2} parent=11 // pred_check_branch
          %196 = sbr.rel (%p194) target = $region24
        $region23: #{pa_layer.2} parent=11 // pred_region
          %s198 = ssub.s32 384, 384
          %199 = vsyncadd [#allocation10], %s198
          %s200 = sshll.u32 [#allocation9], 4
          %s201 = int_to_ptr.vmem [resolvable:$true] %s200
          %206 = dma.hbm_to_vmem [thread:$0]  %s3, 384, %s201, [#allocation10], 128, 128, 8
        $region24: #{pa_layer.2} parent=11 // pred_fallthru
          _
        // Predicated region
        $region25: #{pa_layer.2} parent=11 // pred_check
          %p207 = pneg %p131
        $region26: #{pa_layer.2} parent=11 // pred_check_branch
          %209 = sbr.rel (%p207) target = $region28
        $region27: #{pa_layer.2} parent=11 // pred_region
          _
        $region28: #{pa_layer.2} parent=11 // pred_fallthru
          _
      $region12: #{pa_layer.2} parent=5 // pred_fallthru
        _
      %p210 = scmp.lt.s32.totalorder %s21, 2
      // Predicated region
      $region29: #{pa_layer.2} parent=5 // pred_check
        %p211 = pneg %p210
      $region30: #{pa_layer.2} parent=5 // pred_check_branch
        %213 = sbr.rel (%p211) target = $region32
      $region31: #{pa_layer.2} parent=5 // pred_region
        // Predicated region
        $region33: #{pa_layer.2} parent=31 // pred_check
          %p214 = pneg %p41
        $region34: #{pa_layer.2} parent=31 // pred_check_branch
          %216 = sbr.rel (%p214) target = $region36
        $region35: #{pa_layer.2} parent=31 // pred_region
          %s217 = sand.u32 %s31, 1
          %s218 = scalar_lea.sflag [#allocation4], %s217
          %s219 = sand.u32 %s31, 1
          %s220 = smul.addr %s219, 32
          %s221 = scalar_lea.vmem [#allocation3], %s220
          %s223 = ssub.s32 512, 512
          %224 = vsyncadd %s218, %s223
          %s225 = smul.addr %s21, 4
          %s226 = smul.addr %s225, 128
          %s227 = scalar_lea.hbm %s0, %s226
          %s228 = sshll.u32 %s221, 4
          %s229 = int_to_ptr.vmem [resolvable:$true] %s228
          %234 = dma.hbm_to_vmem [thread:$0]  %s227, 512, %s229, %s218, 256, 256, 16
        $region36: #{pa_layer.2} parent=31 // pred_fallthru
          _
      $region32: #{pa_layer.2} parent=5 // pred_fallthru
        _
      %p235 = scmp.le.s32.totalorder 1, %s21
      %p236 = scmp.lt.s32.totalorder %s21, 3
      %p237 = pnand %p235, %p236
      %p238 = pneg %p237
      // Predicated region
      $region37: #{pa_layer.2} parent=5 // pred_check
        _
      $region38: #{pa_layer.2} parent=5 // pred_check_branch
        %240 = sbr.rel (%p237) target = $region40
      $region39: #{pa_layer.2} parent=5 // pred_region
        %s241 = ssub.s32 %s21, 1
        %s242 = sand.u32 %s34, 1
        %s243 = scalar_lea.sflag [#allocation4], %s242
        %s244 = sand.u32 %s34, 1
        %s245 = smul.addr %s244, 32
        %s246 = scalar_lea.vmem [#allocation3], %s245
        // Predicated region
        $region41: #{pa_layer.2} parent=39 // pred_check
          %p247 = pneg %p47
        $region42: #{pa_layer.2} parent=39 // pred_check_branch
          %249 = sbr.rel (%p247) target = $region44
        $region43: #{pa_layer.2} parent=39 // pred_region
          %250 = dma.done %s243, 512
        $region44: #{pa_layer.2} parent=39 // pred_fallthru
          _
        // Predicated region
        $region45: #{pa_layer.2} parent=39 // pred_check
          %p251 = pneg %p68
        $region46: #{pa_layer.2} parent=39 // pred_check_branch
          %253 = sbr.rel (%p251) target = $region48
        $region47: #{pa_layer.2} parent=39 // pred_region
          %254 = dma.done [#allocation7], 64
        $region48: #{pa_layer.2} parent=39 // pred_fallthru
          _
        // Predicated region
        $region49: #{pa_layer.2} parent=39 // pred_check
          %p255 = pneg %p89
        $region50: #{pa_layer.2} parent=39 // pred_check_branch
          %257 = sbr.rel (%p255) target = $region52
        $region51: #{pa_layer.2} parent=39 // pred_region
          %258 = dma.done [#allocation7], 32
        $region52: #{pa_layer.2} parent=39 // pred_fallthru
          _
        // Predicated region
        $region53: #{pa_layer.2} parent=39 // pred_check
          %p259 = pneg %p110
        $region54: #{pa_layer.2} parent=39 // pred_check_branch
          %261 = sbr.rel (%p259) target = $region56
        $region55: #{pa_layer.2} parent=39 // pred_region
          %262 = dma.done [#allocation10], 384
        $region56: #{pa_layer.2} parent=39 // pred_fallthru
          _
        %s263 = sand.u32 %s34, 1
        %s264 = scalar_lea.sflag [#allocation4], %s263
        %s265 = sand.u32 %s34, 1
        %s266 = smul.addr %s265, 32
        %s267 = scalar_lea.vmem [#allocation3], %s266
        %p268 = pneg %p47
        %p269 = pneg %p44
        %p270 = pneg %p68
        %p271 = pneg %p65
        %p272 = pneg %p89
        %p273 = pneg %p86
        %p274 = pneg %p110
        %p275 = pneg %p107
        %p276 = pneg %p131
        %p277 = pneg %p128
        %p278 = pneg %p157
        %p279 = pneg %p154
        %s280 = sand.u32 %s144, 1
        %s281 = scalar_lea.sflag [#allocation5], %s280
        %s282 = sand.u32 %s144, 1
        %s283 = smul.addr %s282, 2
        %s284 = scalar_lea.vmem [#allocation11], %s283
        %v285 = vlaneseq
        %v286 = vand.u32 %v285, 127
        %v287 = vadd.s32 %v286, 128
        %vm288 = vcmp.lt.s32.totalorder %v286, 0
        %v289 = vsub.s32 0, %v286
        %v290 = vsel %vm288, %v289, %v286
        %v291 = vshrl.u32 %v290, 4
        %v292 = vand.u32 %v290, 15
        %v293 = vsub.s32 0, %v292
        %v294 = vsel %vm288, %v293, %v292
        %vm295 = vcmp.lt.s32.totalorder %v287, 0
        %v296 = vsub.s32 0, %v287
        %v297 = vsel %vm295, %v296, %v287
        %v298 = vshrl.u32 %v297, 4
        %v299 = vand.u32 %v297, 15
        %v300 = vsub.s32 0, %v299
        %v301 = vsel %vm295, %v300, %v299
        %vm302 = vcmp.ne.s32.totalorder %v294, 0
        %vm303 = vcmp.ne.s32.totalorder %v301, 0
        %vm304 = vcmp.lt.s32.totalorder %v294, 0
        %vm305 = vcmp.lt.s32.totalorder %v301, 0
        %vm306 = vmand %vm304, %vm302
        %vm307 = vmand %vm305, %vm303
        %v308 = vadd.s32 %v294, 16
        %v309 = vadd.s32 %v301, 16
        %v310 = vsel %vm306, %v308, %v294
        %v311 = vsel %vm307, %v309, %v301
        %v312 = vld [vmem:[%s246] sm:$0xff]
        %v313 = vld [vmem:[%s246 + $0x8] sm:$0xff]
        %v314 = vld [vmem:[%s246 + $0x10] sm:$0xff]
        %v315 = vld [vmem:[%s246 + $0x18] sm:$0xff]
        %vm316 = vcmp.lt.s32.totalorder %v286, 16
        %vm317 = vcmp.lt.s32.totalorder %v287, 16
        %318 = vrot.lane.b32.xlu0 %v312, 16
        %v319 = vpop.permute.xlu0 %318
        %320 = vrot.lane.b32.xlu0 %v314, 16
        %v321 = vpop.permute.xlu0 %320
        %322 = vrot.lane.b32.xlu0 %v313, 16
        %v323 = vpop.permute.xlu0 %322
        %324 = vrot.lane.b32.xlu0 %v315, 16
        %v325 = vpop.permute.xlu0 %324
        %v326 = vsel %vm316, %v319, %v323
        %v327 = vsel %vm316, %v321, %v325
        %v328 = vsel %vm316, %v323, %v319
        %v329 = vsel %vm316, %v325, %v321
        %v330 = vsel %vm316, 1, 0
        %v331 = vsel %vm317, 1, 0
        %vm332 = vcmp.eq.s32.totalorder %v330, 1
        %vm333 = vcmp.eq.s32.totalorder %v331, 1
        %v334 = vsel %vm332, %v312, %v328
        %v335 = vsel %vm333, %v313, %v326
        %v336 = vsel %vm332, %v314, %v329
        %v337 = vsel %vm333, %v315, %v327
        %vm338 = vcmp.eq.s32.totalorder %v310, 0
        %vm339 = vcmp.eq.s32.totalorder %v311, 0
        %340 = vrot.lane.b32.xlu0 %v334, 1
        %v341 = vpop.permute.xlu0 %340
        %342 = vrot.lane.b32.xlu0 %v336, 1
        %v343 = vpop.permute.xlu0 %342
        %344 = vrot.lane.b32.xlu0 %v335, 1
        %v345 = vpop.permute.xlu0 %344
        %346 = vrot.lane.b32.xlu0 %v337, 1
        %v347 = vpop.permute.xlu0 %346
        %vm348 = vcmp.lt.s32.totalorder %v286, 1
        %v349 = vsel %vm348, %v341, %v345
        %v350 = vsel %vm348, %v343, %v347
        %v351 = vsel %vm348, %v345, %v341
        %v352 = vsel %vm348, %v347, %v343
        %v353 = vsel %vm338, 1, 0
        %v354 = vsel %vm339, 1, 0
        %vm355 = vcmp.eq.s32.totalorder %v353, 1
        %vm356 = vcmp.eq.s32.totalorder %v354, 1
        %v357 = vsel %vm355, %v334, %v351
        %v358 = vsel %vm356, %v335, %v349
        %v359 = vsel %vm355, %v336, %v352
        %v360 = vsel %vm356, %v337, %v350
        %vm361 = vcmp.eq.s32.totalorder %v310, 15
        %vm362 = vcmp.eq.s32.totalorder %v311, 15
        %363 = vrot.lane.b32.xlu0 %v334, 127
        %v364 = vpop.permute.xlu0 %363
        %365 = vrot.lane.b32.xlu0 %v336, 127
        %v366 = vpop.permute.xlu0 %365
        %367 = vrot.lane.b32.xlu0 %v335, 127
        %v368 = vpop.permute.xlu0 %367
        %369 = vrot.lane.b32.xlu0 %v337, 127
        %v370 = vpop.permute.xlu0 %369
        %vm371 = vcmp.lt.s32.totalorder %v286, 127
        %v372 = vsel %vm371, %v364, %v368
        %v373 = vsel %vm371, %v366, %v370
        %v374 = vsel %vm371, %v368, %v364
        %v375 = vsel %vm371, %v370, %v366
        %v376 = vsel %vm361, 1, 0
        %v377 = vsel %vm362, 1, 0
        %vm378 = vcmp.eq.s32.totalorder %v376, 1
        %vm379 = vcmp.eq.s32.totalorder %v377, 1
        %v380 = vsel %vm378, %v334, %v372
        %v381 = vsel %vm379, %v335, %v374
        %v382 = vsel %vm378, %v336, %v373
        %v383 = vsel %vm379, %v337, %v375
        %384 = vrot.lane.b32.xlu0 %v312, 1
        %v385 = vpop.permute.xlu0 %384
        %386 = vrot.lane.b32.xlu0 %v314, 1
        %v387 = vpop.permute.xlu0 %386
        %388 = vrot.lane.b32.xlu0 %v313, 1
        %v389 = vpop.permute.xlu0 %388
        %390 = vrot.lane.b32.xlu0 %v315, 1
        %v391 = vpop.permute.xlu0 %390
        %v392 = vsel %vm348, %v385, %v389
        %v393 = vsel %vm348, %v387, %v391
        %v394 = vsel %vm348, %v389, %v385
        %v395 = vsel %vm348, %v391, %v387
        %v396 = vsel %vm355, %v312, %v394
        %v397 = vsel %vm356, %v313, %v392
        %v398 = vsel %vm355, %v314, %v395
        %v399 = vsel %vm356, %v315, %v393
        %400 = vrot.lane.b32.xlu0 %v312, 127
        %v401 = vpop.permute.xlu0 %400
        %402 = vrot.lane.b32.xlu0 %v314, 127
        %v403 = vpop.permute.xlu0 %402
        %404 = vrot.lane.b32.xlu0 %v313, 127
        %v405 = vpop.permute.xlu0 %404
        %406 = vrot.lane.b32.xlu0 %v315, 127
        %v407 = vpop.permute.xlu0 %406
        %v408 = vsel %vm371, %v401, %v405
        %v409 = vsel %vm371, %v403, %v407
        %v410 = vsel %vm371, %v405, %v401
        %v411 = vsel %vm371, %v407, %v403
        %v412 = vsel %vm378, %v312, %v408
        %v413 = vsel %vm379, %v313, %v410
        %v414 = vsel %vm378, %v314, %v409
        %v415 = vsel %vm379, %v315, %v411
        %vm416 = vcmp.ge.s32.totalorder %v286, 240
        %vm417 = vcmp.ge.s32.totalorder %v287, 240
        %418 = vrot.lane.b32.xlu0 %v312, 112
        %v419 = vpop.permute.xlu0 %418
        %420 = vrot.lane.b32.xlu0 %v314, 112
        %v421 = vpop.permute.xlu0 %420
        %422 = vrot.lane.b32.xlu0 %v313, 112
        %v423 = vpop.permute.xlu0 %422
        %424 = vrot.lane.b32.xlu0 %v315, 112
        %v425 = vpop.permute.xlu0 %424
        %vm426 = vcmp.lt.s32.totalorder %v286, 112
        %v427 = vsel %vm426, %v419, %v423
        %v428 = vsel %vm426, %v421, %v425
        %v429 = vsel %vm426, %v423, %v419
        %v430 = vsel %vm426, %v425, %v421
        %v431 = vsel %vm416, 1, 0
        %v432 = vsel %vm417, 1, 0
        %vm433 = vcmp.eq.s32.totalorder %v431, 1
        %vm434 = vcmp.eq.s32.totalorder %v432, 1
        %v435 = vsel %vm433, %v312, %v427
        %v436 = vsel %vm434, %v313, %v429
        %v437 = vsel %vm433, %v314, %v428
        %v438 = vsel %vm434, %v315, %v430
        %439 = vrot.lane.b32.xlu0 %v435, 1
        %v440 = vpop.permute.xlu0 %439
        %441 = vrot.lane.b32.xlu0 %v437, 1
        %v442 = vpop.permute.xlu0 %441
        %443 = vrot.lane.b32.xlu0 %v436, 1
        %v444 = vpop.permute.xlu0 %443
        %445 = vrot.lane.b32.xlu0 %v438, 1
        %v446 = vpop.permute.xlu0 %445
        %v447 = vsel %vm348, %v440, %v444
        %v448 = vsel %vm348, %v442, %v446
        %v449 = vsel %vm348, %v444, %v440
        %v450 = vsel %vm348, %v446, %v442
        %v451 = vsel %vm355, %v435, %v449
        %v452 = vsel %vm356, %v436, %v447
        %v453 = vsel %vm355, %v437, %v450
        %v454 = vsel %vm356, %v438, %v448
        %455 = vrot.lane.b32.xlu0 %v435, 127
        %v456 = vpop.permute.xlu0 %455
        %457 = vrot.lane.b32.xlu0 %v437, 127
        %v458 = vpop.permute.xlu0 %457
        %459 = vrot.lane.b32.xlu0 %v436, 127
        %v460 = vpop.permute.xlu0 %459
        %461 = vrot.lane.b32.xlu0 %v438, 127
        %v462 = vpop.permute.xlu0 %461
        %v463 = vsel %vm371, %v456, %v460
        %v464 = vsel %vm371, %v458, %v462
        %v465 = vsel %vm371, %v460, %v456
        %v466 = vsel %vm371, %v462, %v458
        %v467 = vsel %vm378, %v435, %v463
        %v468 = vsel %vm379, %v436, %v465
        %v469 = vsel %vm378, %v437, %v464
        %v470 = vsel %vm379, %v438, %v466
        %v471 = vld [vmem:[#allocation6] sm:$0xf]
        %v472 = vld [vmem:[#allocation8] sm:$0x3]
        %474 = vset.pattern.permute.xlu0 0
        %475 = vperm.xlu0 %474, %v472
        %v476 = vpop.permute.xlu0 %475
        %v480 = vunpack.c.l.s4 1983009808
        %v481 = vunpack.c.0.s8 %v480
        %v482 = vlaneseq
        %v483 = vshrl.u32 %v482, 7
        %v484 = vsub.s32 %v481, %v483
        %v485 = vrot.slane %v471, %v484
        %v486 = vcombine.high %v485, %v485
        %vm488 = vcmask 130048
        %v489 = vsel %vm488, %v486, 0
        %491 = vmatprep.subr.mxu0 %v358
        %492 = vmatpush1.msra.mxu0 %v357
        %493 = vmatprep.subr.mxu0 %v360
        %494 = vmatpush1.msra.mxu0 %v359
        %495 = vmatprep.subr.mxu0 %v335
        %496 = vmatpush1.msra.mxu0 %v334
        %497 = vmatprep.subr.mxu0 %v337
        %498 = vmatpush1.msra.mxu0 %v336
        %499 = vmatprep.subr.mxu0 %v381
        %500 = vmatpush1.msra.mxu0 %v380
        %501 = vmatprep.subr.mxu0 %v383
        %502 = vmatpush1.msra.mxu0 %v382
        %503 = vmatprep.subr.mxu0 %v397
        %504 = vmatpush1.msra.mxu0 %v396
        %505 = vmatprep.subr.mxu0 %v399
        %506 = vmatpush1.msra.mxu0 %v398
        %507 = vmatprep.subr.mxu0 %v313
        %508 = vmatpush1.msra.mxu0 %v312
        %509 = vmatprep.subr.mxu0 %v315
        %510 = vmatpush1.msra.mxu0 %v314
        %511 = vmatprep.subr.mxu0 %v413
        %512 = vmatpush1.msra.mxu0 %v412
        %513 = vmatprep.subr.mxu0 %v415
        %514 = vmatpush1.msra.mxu0 %v414
        %515 = vmatprep.subr.mxu0 %v452
        %516 = vmatpush1.msra.mxu0 %v451
        %517 = vmatprep.subr.mxu0 %v454
        %518 = vmatpush1.msra.mxu0 %v453
        %519 = vmatprep.subr.mxu0 %v436
        %520 = vmatpush1.msra.mxu0 %v435
        %521 = vmatprep.subr.mxu0 %v438
        %522 = vmatpush1.msra.mxu0 %v437
        %523 = vmatprep.subr.mxu0 %v468
        %524 = vmatpush1.msra.mxu0 %v467
        %525 = vmatprep.subr.mxu0 %v470
        %526 = vmatpush1.msra.mxu0 %v469
        %527 = vmatprep.subr.mxu0 0.0
        %528 = vmatpush1.msra.mxu0 0.0
        %529 = vmatprep.subr.mxu0 0.0
        %530 = vmatpush1.msra.mxu0 0.0
        %531 = vmatprep.subr.mxu0 0.0
        %532 = vmatpush1.msra.mxu0 0.0
        %533 = vmatprep.subr.mxu0 0.0
        %534 = vmatpush1.msra.mxu0 0.0
        %535 = vmatprep.subr.mxu0 0.0
        %536 = vmatpush1.msra.mxu0 0.0
        %537 = vmatprep.subr.mxu0 0.0
        %538 = vmatpush1.msra.mxu0 0.0
        %539 = vmatprep.subr.mxu0 0.0
        %540 = vmatpush1.msra.mxu0 0.0
        %541 = vmatprep.subr.mxu0 0.0
        %542 = vmatpush1.msra.mxu0 0.0
        %543 = vmatprep.subr.mxu0 0.0
        %544 = vmatpush1.msra.mxu0 0.0
        %545 = vmatprep.subr.mxu0 0.0
        %546 = vmatpush1.msra.mxu0 0.0
        %547 = vmatprep.subr.mxu0 0.0
        %548 = vmatpush1.msra.mxu0 0.0
        %549 = vmatprep.subr.mxu0 0.0
        %550 = vmatpush1.msra.mxu0 0.0
        %551 = vmatprep.subr.mxu0 0.0
        %552 = vmatpush1.msra.mxu0 0.0
        %553 = vmatprep.subr.mxu0 0.0
        %554 = vmatpush1.msra.mxu0 0.0
        %555 = vmatprep.mubr.f32.mxu0 %v489
        %556 = vmatmul.mubr.f32.gmra.mrb[0].mxu0 %v485
        %v557 = vpop.f32.mrb[0].mxu0
        %v558 = vadd.f32 %v476, %v557
        %v559 = vpop.f32.mrb[0].mxu0
        %v560 = vadd.f32 %v476, %v559
        %561 = vdwg.mxu0
        %v562 = vmax.f32 %v558, 0.0
        %v563 = vmax.f32 %v560, 0.0
        %564 = vrot.lane.b32.xlu0 %v562, 16
        %v565 = vpop.permute.xlu0 %564
        %566 = vrot.lane.b32.xlu0 %v563, 16
        %v567 = vpop.permute.xlu0 %566
        %v568 = vsel %vm316, %v565, %v567
        %v569 = vsel %vm316, %v567, %v565
        %v570 = vsel %vm332, %v562, %v569
        %v571 = vsel %vm333, %v563, %v568
        %572 = vrot.lane.b32.xlu0 %v570, 1
        %v573 = vpop.permute.xlu0 %572
        %574 = vrot.lane.b32.xlu0 %v571, 1
        %v575 = vpop.permute.xlu0 %574
        %v576 = vsel %vm348, %v573, %v575
        %v577 = vsel %vm348, %v575, %v573
        %v578 = vsel %vm355, %v570, %v577
        %v579 = vsel %vm356, %v571, %v576
        %v580 = vld [vmem:[#allocation9] sm:$0x3]
        %582 = vset.pattern.permute.xlu0 0
        %583 = vperm.xlu0 %582, %v580
        %v584 = vpop.permute.xlu0 %583
        %v586 = vmul.f32 %v578, %v584
        %v587 = vmul.f32 %v579, %v584
        %v588 = vadd.f32 %v586, 0.0
        %v589 = vadd.f32 %v587, 0.0
        %v590 = vld [vmem:[#allocation9 + $0x2] sm:$0x3]
        %592 = vset.pattern.permute.xlu0 0
        %593 = vperm.xlu0 %592, %v590
        %v594 = vpop.permute.xlu0 %593
        %v596 = vmul.f32 %v570, %v594
        %v597 = vmul.f32 %v571, %v594
        %v598 = vadd.f32 %v588, %v596
        %v599 = vadd.f32 %v589, %v597
        %600 = vrot.lane.b32.xlu0 %v570, 127
        %v601 = vpop.permute.xlu0 %600
        %602 = vrot.lane.b32.xlu0 %v571, 127
        %v603 = vpop.permute.xlu0 %602
        %v604 = vsel %vm371, %v601, %v603
        %v605 = vsel %vm371, %v603, %v601
        %v606 = vsel %vm378, %v570, %v604
        %v607 = vsel %vm379, %v571, %v605
        %v608 = vld [vmem:[#allocation9 + $0x4] sm:$0x3]
        %610 = vset.pattern.permute.xlu0 0
        %611 = vperm.xlu0 %610, %v608
        %v612 = vpop.permute.xlu0 %611
        %v614 = vmul.f32 %v606, %v612
        %v615 = vmul.f32 %v607, %v612
        %v616 = vadd.f32 %v598, %v614
        %v617 = vadd.f32 %v599, %v615
        %618 = vrot.lane.b32.xlu0 %v562, 1
        %v619 = vpop.permute.xlu0 %618
        %620 = vrot.lane.b32.xlu0 %v563, 1
        %v621 = vpop.permute.xlu0 %620
        %v622 = vsel %vm348, %v619, %v621
        %v623 = vsel %vm348, %v621, %v619
        %v624 = vsel %vm355, %v562, %v623
        %v625 = vsel %vm356, %v563, %v622
        %v626 = vld [vmem:[#allocation9 + $0x6] sm:$0x3]
        %628 = vset.pattern.permute.xlu0 0
        %629 = vperm.xlu0 %628, %v626
        %v630 = vpop.permute.xlu0 %629
        %v632 = vmul.f32 %v624, %v630
        %v633 = vmul.f32 %v625, %v630
        %v634 = vadd.f32 %v616, %v632
        %v635 = vadd.f32 %v617, %v633
        %v636 = vld [vmem:[#allocation9 + $0x8] sm:$0x3]
        %638 = vset.pattern.permute.xlu0 0
        %639 = vperm.xlu0 %638, %v636
        %v640 = vpop.permute.xlu0 %639
        %v642 = vmul.f32 %v562, %v640
        %v643 = vmul.f32 %v563, %v640
        %v644 = vadd.f32 %v634, %v642
        %v645 = vadd.f32 %v635, %v643
        %646 = vrot.lane.b32.xlu0 %v562, 127
        %v647 = vpop.permute.xlu0 %646
        %648 = vrot.lane.b32.xlu0 %v563, 127
        %v649 = vpop.permute.xlu0 %648
        %v650 = vsel %vm371, %v647, %v649
        %v651 = vsel %vm371, %v649, %v647
        %v652 = vsel %vm378, %v562, %v650
        %v653 = vsel %vm379, %v563, %v651
        %v654 = vld [vmem:[#allocation9 + $0xa] sm:$0x3]
        %656 = vset.pattern.permute.xlu0 0
        %657 = vperm.xlu0 %656, %v654
        %v658 = vpop.permute.xlu0 %657
        %v660 = vmul.f32 %v652, %v658
        %v661 = vmul.f32 %v653, %v658
        %v662 = vadd.f32 %v644, %v660
        %v663 = vadd.f32 %v645, %v661
        %664 = vrot.lane.b32.xlu0 %v562, 112
        %v665 = vpop.permute.xlu0 %664
        %666 = vrot.lane.b32.xlu0 %v563, 112
        %v667 = vpop.permute.xlu0 %666
        %v668 = vsel %vm426, %v665, %v667
        %v669 = vsel %vm426, %v667, %v665
        %v670 = vsel %vm433, %v562, %v668
        %v671 = vsel %vm434, %v563, %v669
        %672 = vrot.lane.b32.xlu0 %v670, 1
        %v673 = vpop.permute.xlu0 %672
        %674 = vrot.lane.b32.xlu0 %v671, 1
        %v675 = vpop.permute.xlu0 %674
        %v676 = vsel %vm348, %v673, %v675
        %v677 = vsel %vm348, %v675, %v673
        %v678 = vsel %vm355, %v670, %v677
        %v679 = vsel %vm356, %v671, %v676
        %v680 = vld [vmem:[#allocation9 + $0xc] sm:$0x3]
        %682 = vset.pattern.permute.xlu0 0
        %683 = vperm.xlu0 %682, %v680
        %v684 = vpop.permute.xlu0 %683
        %v686 = vmul.f32 %v678, %v684
        %v687 = vmul.f32 %v679, %v684
        %v688 = vadd.f32 %v662, %v686
        %v689 = vadd.f32 %v663, %v687
        %v690 = vld [vmem:[#allocation9 + $0xe] sm:$0x3]
        %692 = vset.pattern.permute.xlu0 0
        %693 = vperm.xlu0 %692, %v690
        %v694 = vpop.permute.xlu0 %693
        %v696 = vmul.f32 %v670, %v694
        %v697 = vmul.f32 %v671, %v694
        %v698 = vadd.f32 %v688, %v696
        %v699 = vadd.f32 %v689, %v697
        %700 = vrot.lane.b32.xlu0 %v670, 127
        %v701 = vpop.permute.xlu0 %700
        %702 = vrot.lane.b32.xlu0 %v671, 127
        %v703 = vpop.permute.xlu0 %702
        %v704 = vsel %vm371, %v701, %v703
        %v705 = vsel %vm371, %v703, %v701
        %v706 = vsel %vm378, %v670, %v704
        %v707 = vsel %vm379, %v671, %v705
        %v708 = vld [vmem:[#allocation9 + $0x10] sm:$0x3]
        %710 = vset.pattern.permute.xlu0 0
        %711 = vperm.xlu0 %710, %v708
        %v712 = vpop.permute.xlu0 %711
        %v714 = vmul.f32 %v706, %v712
        %v715 = vmul.f32 %v707, %v712
        %v716 = vadd.f32 %v698, %v714
        %v717 = vadd.f32 %v699, %v715
        %vm718 = vcmask 1041408
        %v719 = vsel %vm718, %v716, 0.0
        %v720 = vrot.slane %v719, 4
        %v721 = vadd.f32 %v719, %v720
        %v722 = vrot.slane %v721, 2
        %v723 = vadd.f32 %v721, %v722
        %v724 = vrot.slane %v723, 1
        %v725 = vadd.f32 %v723, %v724
        %v726 = vsel %vm718, %v717, 0.0
        %v727 = vrot.slane %v726, 4
        %v728 = vadd.f32 %v726, %v727
        %v729 = vrot.slane %v728, 2
        %v730 = vadd.f32 %v728, %v729
        %v731 = vrot.slane %v730, 1
        %v732 = vadd.f32 %v730, %v731
        %v733 = vld [vmem:[#allocation2] sm:$0x1]
        %735 = vset.pattern.permute.xlu0 0
        %736 = vperm.xlu0 %735, %v733
        %v737 = vpop.permute.xlu0 %736
        %v739 = vlaneseq
        %v740 = vshrl.u32 %v739, 7
        %v741 = vsub.s32 0, %v740
        %v742 = vrot.slane %v737, %v741
        %v743 = vadd.f32 %v725, %v742
        %v744 = vadd.f32 %v732, %v742
        %v745 = vxor.u32 %v743, 2147483648
        %v746 = vxor.u32 %v744, 2147483648
        %v747 = vmul.f32 %v745, 1.442695
        %v748 = vpow.pop %v747
        %v749 = vmul.f32 %v746, 1.442695
        %v750 = vpow.pop %v749
        %v751 = vadd.f32 %v748, 1.0
        %v752 = vadd.f32 %v750, 1.0
        %v753 = vrcp.pop %v751
        %v754 = vmul.f32 1.0, %v753
        %v755 = vrcp.pop %v752
        %v756 = vmul.f32 1.0, %v755
        %v759 = vcombine.low %v754, %v756
        %v761 = vunpack.c.l.s4 1966171168
        %v762 = vunpack.c.0.s8 %v761
        %v763 = vlaneseq
        %v764 = vshrl.u32 %v763, 7
        %v765 = vsub.s32 %v762, %v764
        %v766 = vrot.slane %v759, %v765
        %v768 = vunpack.c.l.s4 1966171168
        %v769 = vunpack.c.0.s8 %v768
        %v770 = vlaneseq
        %v771 = vshrl.u32 %v770, 7
        %v772 = vsub.s32 %v769, %v771
        %v773 = vrot.slane %v766, %v772
        %v775 = vlaneseq
        %vm776 = vcmp.ge.s32.totalorder %v775, 0
        %vm777 = vcmp.lt.s32.totalorder %v775, 256
        %vm778 = vmand %vm776, %vm777
        %779 = vst.msk [vmem:[%s284] sm:$0x3] %vm778, %v773
        %s780 = sand.u32 %s144, 1
        %s781 = scalar_lea.sflag [#allocation5], %s780
        %s782 = sand.u32 %s144, 1
        %s783 = smul.addr %s782, 2
        %s784 = scalar_lea.vmem [#allocation11], %s783
        // Predicated region
        $region57: #{pa_layer.2} parent=39 // pred_check
          %p785 = pneg %p154
        $region58: #{pa_layer.2} parent=39 // pred_check_branch
          %787 = sbr.rel (%p785) target = $region60
        $region59: #{pa_layer.2} parent=39 // pred_region
          %s789 = ssub.s32 32, 32
          %790 = vsyncadd %s781, %s789
          %s791 = smul.addr %s26, 2
          %s792 = smul.addr %s791, 16
          %s793 = scalar_lea.hbm %s5, %s792
          %s795 = sshll.u32 %s784, 4
          %s796 = int_to_ptr.vmem [resolvable:$true] %s795
          %798 = dma.vmem_to_hbm [thread:$0]  %s796, 32, %s793, %s781
        $region60: #{pa_layer.2} parent=39 // pred_fallthru
          _
      $region40: #{pa_layer.2} parent=5 // pred_fallthru
        _
      %p799 = scmp.le.s32.totalorder 2, %s21
      // Predicated region
      $region61: #{pa_layer.2} parent=5 // pred_check
        %p800 = pneg %p799
      $region62: #{pa_layer.2} parent=5 // pred_check_branch
        %802 = sbr.rel (%p800) target = $region64
      $region63: #{pa_layer.2} parent=5 // pred_region
        %s803 = ssub.s32 %s21, 2
        // Predicated region
        $region65: #{pa_layer.2} parent=63 // pred_check
          %p804 = pneg %p160
        $region66: #{pa_layer.2} parent=63 // pred_check_branch
          %806 = sbr.rel (%p804) target = $region68
        $region67: #{pa_layer.2} parent=63 // pred_region
          %s807 = sand.u32 %s145, 1
          %s808 = scalar_lea.sflag [#allocation5], %s807
          %s809 = sand.u32 %s145, 1
          %s810 = smul.addr %s809, 2
          %s811 = scalar_lea.vmem [#allocation11], %s810
          %812 = dma.done %s808, 32
        $region68: #{pa_layer.2} parent=63 // pred_fallthru
          _
      $region64: #{pa_layer.2} parent=5 // pred_fallthru
        _
    $region6: #{pa_layer.2} parent=1 // loop_footer
      %s25 = sadd.s32 1, %s21
    $region7: #{pa_layer.2} parent=1 // loop_footer_branch
      %20 = sbr.rel target = $region3
    $region8: #{pa_layer.2} parent=1 // loop_exit
      _
    %813 = vsyncpa [#allocation4], 1
    %s814 = scalar_lea.sflag [#allocation4], 1
    %815 = vsyncpa %s814, 1
    %816 = vsyncpa [#allocation7], 1
    %817 = vsyncpa [#allocation10], 1
    %818 = vsyncpa [#allocation5], 1
    %s819 = scalar_lea.sflag [#allocation5], 1
    %820 = vsyncpa %s819, 1

</llo_original>
